<compile_context>
chip_gen: v7x
topology: tpu7x:2x2x1
jax: 0.10.0
libtpu: 0.0.40
codegen_flags: <defaults>
</compile_context>

<pallas_src>
import jax
import jax.numpy as jnp
from jax.experimental import pallas as pl
from jax.experimental.pallas import tpu as pltpu
from typing import NamedTuple

_LANE = 128      # vreg lane width
_SUBLANE = 8     # f32 sublane width


def _round_up(x: int, m: int) -> int:
    return ((x + m - 1) // m) * m


class PolicyParams(NamedTuple):
    # Original (in, out)-layout weights -- used by the small-batch fallback.
    w1: jax.Array   # (S, H)
    b1: jax.Array   # (H,)
    w2: jax.Array   # (H, A)
    b2: jax.Array   # (A,)
    # Padded, feature-major weights -- built ONCE for the Pallas path.
    w1T: jax.Array  # (H_pad, S_pad)
    b1T: jax.Array  # (H_pad, 1)
    w2T: jax.Array  # (A_pad, H_pad)
    b2T: jax.Array  # (A_pad, 1)


def prepare_params(w1, b1, w2, b2) -> PolicyParams:
    """Build the padded, transposed weight set once (amortized over all calls)."""
    S, H = w1.shape
    A = w2.shape[1]
    S_pad = _round_up(S, _SUBLANE)
    H_pad = _round_up(H, _SUBLANE)   # H only sits on sublane/contraction axes -> x8, not x128
    A_pad = _round_up(A, _SUBLANE)
    f32 = jnp.float32
    w1T = jnp.zeros((H_pad, S_pad), f32).at[:H, :S].set(w1.T.astype(f32))
    b1T = jnp.zeros((H_pad, 1), f32).at[:H, 0].set(b1.reshape(-1).astype(f32))
    w2T = jnp.zeros((A_pad, H_pad), f32).at[:A, :H].set(w2.T.astype(f32))
    b2T = jnp.zeros((A_pad, 1), f32).at[:A, 0].set(b2.reshape(-1).astype(f32))
    return PolicyParams(w1, b1, w2, b2, w1T, b1T, w2T, b2T)


def _policy_kernel(xT_ref, w1T_ref, b1T_ref, w2T_ref, b2T_ref, oT_ref):
    # xT:  (S_pad, Bt)     -- batch on lanes
    # w1T: (H_pad, S_pad)  b1T: (H_pad, 1)
    # w2T: (A_pad, H_pad)  b2T: (A_pad, 1)
    # oT:  (A_pad, Bt)
    h = jnp.dot(w1T_ref[...], xT_ref[...], preferred_element_type=jnp.float32)
    h = jnp.maximum(h + b1T_ref[...], 0.0)            # (H_pad, Bt) + (H_pad, 1)
    out = jnp.dot(w2T_ref[...], h, preferred_element_type=jnp.float32)
    oT_ref[...] = (out + b2T_ref[...]).astype(oT_ref.dtype)


def _pick_batch_tile(B: int, block_b: int) -> int:
    """Batch tile: multiple of 128, capped by block_b, >=2 grid steps when possible."""
    B128 = _round_up(max(B, 1), _LANE)
    half = _round_up(-(-B128 // 2), _LANE)            # ceil(B128/2) rounded to 128
    return min(_round_up(block_b, _LANE), max(_LANE, half))


def policy_forward_xT(xT, params: PolicyParams, *, block_b: int = 2048):
    """Pallas path on an already padded, feature-major input xT: (S_pad, B_pad) f32.

    Returns padded, feature-major logits oT: (A_pad, B_pad) f32.
    Use this entry point in a tight loop to avoid the wrapper's pad+transpose
    HBM round-trip.
    """
    S_pad, B_pad = xT.shape
    H_pad = params.w1T.shape[0]
    A_pad = params.w2T.shape[0]

    Bt = _pick_batch_tile(B_pad, block_b)
    if B_pad % Bt != 0:
        Bt = _LANE if B_pad % _LANE == 0 else B_pad   # always divides (wrapper pads to Bt)
    grid = (B_pad // Bt,)

    # Rough VMEM need: double-buffered x/o tiles + resident weights + h intermediate.
    vmem_bytes = 4 * (2 * (S_pad + A_pad) * Bt
                      + H_pad * (S_pad + 1) + A_pad * (H_pad + 1)
                      + H_pad * Bt)
    ck = dict(dimension_semantics=("parallel",))      # v7x: shard batch over 2 TCs
    if vmem_bytes > 12 * 1024 * 1024:                 # only if block_b pushed very high (v5e: 16 MiB default)
        ck["vmem_limit_bytes"] = min(2 * vmem_bytes, 64 * 1024 * 1024)

    return pl.pallas_call(
        _policy_kernel,
        out_shape=jax.ShapeDtypeStruct((A_pad, B_pad), jnp.float32),
        grid=grid,
        in_specs=[
            pl.BlockSpec((S_pad, Bt), lambda i: (0, i)),        # input tile (batch-blocked)
            pl.BlockSpec((H_pad, S_pad), lambda i: (0, 0)),     # W1.T  (VMEM-resident)
            pl.BlockSpec((H_pad, 1), lambda i: (0, 0)),         # b1
            pl.BlockSpec((A_pad, H_pad), lambda i: (0, 0)),     # W2.T
            pl.BlockSpec((A_pad, 1), lambda i: (0, 0)),         # b2
        ],
        out_specs=pl.BlockSpec((A_pad, Bt), lambda i: (0, i)),  # lane-dense logits tile
        compiler_params=pltpu.CompilerParams(**ck),
    )(xT, params.w1T, params.b1T, params.w2T, params.b2T)


def policy_network_forward(states, params: PolicyParams, *,
                           block_b: int = 2048, min_pallas_batch: int = 1024):
    """states: (B, num_states) -> (B, num_actions) logits.
    Matches torch: pi_out(relu(h1(states))) with weights stored as (in, out).
    """
    B, S = states.shape
    A = params.w2.shape[1]

    if B < min_pallas_batch:
        # Small-batch fallback: at tiny B the 128-lane padding + fixed dispatch
        # overhead of the Pallas path dominates; a fused XLA dot is strictly faster.
        h = jnp.maximum(states.astype(jnp.float32) @ params.w1 + params.b1[None, :], 0.0)
        return h @ params.w2 + params.b2[None, :]

    S_pad = params.w1T.shape[1]
    Bt = _pick_batch_tile(B, block_b)
    B_pad = _round_up(B, Bt)
    # Zero-pad + transpose input to feature-major (batch on lanes); numerically free.
    xT = jnp.zeros((S_pad, B_pad), jnp.float32).at[:S, :B].set(states.T.astype(jnp.float32))
    outT = policy_forward_xT(xT, params, block_b=block_b)
    # Strip padding and return row-major (B, num_actions) like the torch module.
    return outT[:A, :B].T


def init_params(key, num_states, num_actions, hdim=80):
    """Deterministic synthetic init mirroring torch.nn.Linear shapes
    (stored as (in, out) for the kernel)."""
    k1, k2, k3, k4 = jax.random.split(key, 4)
    bound1 = 1.0 / (num_states ** 0.5)
    bound2 = 1.0 / (hdim ** 0.5)
    w1 = jax.random.uniform(k1, (num_states, hdim), jnp.float32, -bound1, bound1)
    b1 = jax.random.uniform(k2, (hdim,), jnp.float32, -bound1, bound1)
    w2 = jax.random.uniform(k3, (hdim, num_actions), jnp.float32, -bound2, bound2)
    b2 = jax.random.uniform(k4, (num_actions,), jnp.float32, -bound2, bound2)
    return w1, b1, w2, b2


if __name__ == "__main__":
    # CartPole-like sizes: 4 state dims, 2 actions, hidden 80.
    batch, num_states, num_actions, hdim = 8, 4, 2, 80

    key = jax.random.PRNGKey(0)
    k_x1, k_x2, k_p = jax.random.split(key, 3)
    states_small = jax.random.normal(k_x1, (batch, num_states), dtype=jnp.float32)
    states_big = jax.random.normal(k_x2, (384, num_states), dtype=jnp.float32)

    w1, b1, w2, b2 = init_params(k_p, num_states, num_actions, hdim)
    params = prepare_params(w1, b1, w2, b2)   # padded/transposed weights built ONCE

    def ref(x):
        return jnp.maximum(x @ w1 + b1[None, :], 0.0) @ w2 + b2[None, :]

    # Force the Pallas path (min_pallas_batch=0) so the kernel is exercised.
    pallas_fwd = jax.jit(lambda s: policy_network_forward(s, params, min_pallas_batch=0))

    # 1) Tiny CartPole batch through the Pallas kernel (grid=(1,)).
    out_small = jax.block_until_ready(pallas_fwd(states_small))
    assert out_small.shape == (batch, num_actions)
    assert jnp.allclose(out_small, ref(states_small), atol=1e-4, rtol=1e-4)

    # 2) Larger batch -> multi-step grid (Bt=256, 2 steps; both v7x TCs usable).
    out_big = jax.block_until_ready(pallas_fwd(states_big))
    assert out_big.shape == (384, num_actions)
    assert jnp.allclose(out_big, ref(states_big), atol=1e-4, rtol=1e-4)

    # 3) Default small-batch fallback (plain fused XLA dot) matches too.
    out_fb = jax.block_until_ready(
        jax.jit(lambda s: policy_network_forward(s, params))(states_small))
    assert jnp.allclose(out_fb, ref(states_small), atol=1e-4, rtol=1e-4)

    print("KERNEL_OK")
</pallas_src>

<mosaic_0001>
module attributes {stable_mosaic.version = 11 : i64} {
  func.func @_policy_kernel(%arg0: i32, %arg1: memref<8x128xf32, #tpu.memory_space<vmem>>, %arg2: memref<80x8xf32, #tpu.memory_space<vmem>>, %arg3: memref<80x1xf32, #tpu.memory_space<vmem>>, %arg4: memref<8x80xf32, #tpu.memory_space<vmem>>, %arg5: memref<8x1xf32, #tpu.memory_space<vmem>>, %arg6: memref<8x128xf32, #tpu.memory_space<vmem>>) attributes {dimension_semantics = [#tpu.dimension_semantics<parallel>], iteration_bounds = array<i64: 1>, scalar_prefetch = 0 : i64, scratch_operands = 0 : i64, tpu.core_type = #tpu.core_type<tc>, window_params = [{transform_indices = @transform_0, window_bounds = array<i64: 8, 128>}, {pipeline_mode = #tpu.pipeline_mode<synchronous>, transform_indices = @transform_1, window_bounds = array<i64: 80, 8>}, {pipeline_mode = #tpu.pipeline_mode<synchronous>, transform_indices = @transform_2, window_bounds = array<i64: 80, 1>}, {pipeline_mode = #tpu.pipeline_mode<synchronous>, transform_indices = @transform_3, window_bounds = array<i64: 8, 80>}, {pipeline_mode = #tpu.pipeline_mode<synchronous>, transform_indices = @transform_4, window_bounds = array<i64: 8, 1>}, {transform_indices = @transform_5, window_bounds = array<i64: 8, 128>}]} {
    %c0 = arith.constant 0 : index
    %c0_0 = arith.constant 0 : index
    %0 = vector.load %arg2[%c0, %c0_0] : memref<80x8xf32, #tpu.memory_space<vmem>>, vector<80x8xf32>
    %c0_1 = arith.constant 0 : index
    %c0_2 = arith.constant 0 : index
    %1 = vector.load %arg1[%c0_1, %c0_2] : memref<8x128xf32, #tpu.memory_space<vmem>>, vector<8x128xf32>
    %cst = arith.constant dense<0.000000e+00> : vector<80x128xf32>
    %2 = tpu.matmul %0, %1, %cst {dimension_numbers = #tpu.dot_dimension_numbers<[1], [0], [0], [1], [0, 0, 1, 1], [], []>} : vector<80x8xf32>, vector<8x128xf32>, vector<80x128xf32> -> vector<80x128xf32>
    %c0_3 = arith.constant 0 : index
    %c0_4 = arith.constant 0 : index
    %3 = vector.load %arg3[%c0_3, %c0_4] : memref<80x1xf32, #tpu.memory_space<vmem>>, vector<80x1xf32>
    %4 = vector.broadcast %3 : vector<80x1xf32> to vector<80x128xf32>
    %5 = arith.addf %2, %4 : vector<80x128xf32>
    %cst_5 = arith.constant 0.000000e+00 : f32
    %6 = vector.broadcast %cst_5 : f32 to vector<80x128xf32>
    %7 = arith.maximumf %5, %6 : vector<80x128xf32>
    %c0_6 = arith.constant 0 : index
    %c0_7 = arith.constant 0 : index
    %8 = vector.load %arg4[%c0_6, %c0_7] : memref<8x80xf32, #tpu.memory_space<vmem>>, vector<8x80xf32>
    %cst_8 = arith.constant dense<0.000000e+00> : vector<8x128xf32>
    %9 = tpu.matmul %8, %7, %cst_8 {dimension_numbers = #tpu.dot_dimension_numbers<[1], [0], [0], [1], [0, 0, 1, 1], [], []>} : vector<8x80xf32>, vector<80x128xf32>, vector<8x128xf32> -> vector<8x128xf32>
    %c0_9 = arith.constant 0 : index
    %c0_10 = arith.constant 0 : index
    %10 = vector.load %arg5[%c0_9, %c0_10] : memref<8x1xf32, #tpu.memory_space<vmem>>, vector<8x1xf32>
    %11 = vector.broadcast %10 : vector<8x1xf32> to vector<8x128xf32>
    %12 = arith.addf %9, %11 : vector<8x128xf32>
    %c0_11 = arith.constant 0 : index
    %c0_12 = arith.constant 0 : index
    %13 = vector.load %arg6[%c0_11, %c0_12] : memref<8x128xf32, #tpu.memory_space<vmem>>, vector<8x128xf32>
    tpu.vector_store %arg6[%c0_11, %c0_12], %12 {strides = array<i32>} : memref<8x128xf32, #tpu.memory_space<vmem>>, vector<8x128xf32>,
    return
  }
  func.func @transform_0(%arg0: i32) -> (i32, i32) {
    %c0_i32 = arith.constant 0 : i32
    %c0_i32_0 = arith.constant 0 : i32
    return %c0_i32, %arg0 : i32, i32
  }
  func.func @transform_1(%arg0: i32) -> (i32, i32) {
    %c0_i32 = arith.constant 0 : i32
    %c0_i32_0 = arith.constant 0 : i32
    %c0_i32_1 = arith.constant 0 : i32
    return %c0_i32, %c0_i32_0 : i32, i32
  }
  func.func @transform_2(%arg0: i32) -> (i32, i32) {
    %c0_i32 = arith.constant 0 : i32
    %c0_i32_0 = arith.constant 0 : i32
    %c0_i32_1 = arith.constant 0 : i32
    return %c0_i32, %c0_i32_0 : i32, i32
  }
  func.func @transform_3(%arg0: i32) -> (i32, i32) {
    %c0_i32 = arith.constant 0 : i32
    %c0_i32_0 = arith.constant 0 : i32
    %c0_i32_1 = arith.constant 0 : i32
    return %c0_i32, %c0_i32_0 : i32, i32
  }
  func.func @transform_4(%arg0: i32) -> (i32, i32) {
    %c0_i32 = arith.constant 0 : i32
    %c0_i32_0 = arith.constant 0 : i32
    %c0_i32_1 = arith.constant 0 : i32
    return %c0_i32, %c0_i32_0 : i32, i32
  }
  func.func @transform_5(%arg0: i32) -> (i32, i32) {
    %c0_i32 = arith.constant 0 : i32
    %c0_i32_0 = arith.constant 0 : i32
    return %c0_i32, %arg0 : i32, i32
  }
}

</mosaic_0001>

<llo_original>
// kernel: _lambda_.1
$region0: #{_lambda_.1}
  #allocation0 [shape = 'u32[]', space=smem, size = 0x4, offset = 0x4, fixed_abs, tag = 'smem constant byte address 0x4 - core index']
  #allocation1 [shape = 'u32[144,128]{1,0:T(1,128)}', space=vmem, size = 0x12000, scoped, tag = 'internal scratch']
  %s0 = inlined_call_operand.vmem [shape: f32[8,128], index: 0, kind: input, shape index: {}]
  %s1 = inlined_call_operand.hbm [shape: f32[80,8], index: 1, kind: input, shape index: {}]
  %s2 = inlined_call_operand.hbm [shape: f32[80,1], index: 2, kind: input, shape index: {}]
  %s3 = inlined_call_operand.vmem [shape: f32[8,80], index: 3, kind: input, shape index: {}]
  %s4 = inlined_call_operand.vmem [shape: f32[8,1], index: 4, kind: input, shape index: {}]
  %s5 = inlined_call_operand.vmem [shape: f32[8,128], index: 5, kind: output, shape index: {}]
  %s6 = sld [smem:[#allocation0]]
  $region38: #{_lambda_.1} parent=0
    _
  %s8 = ssub.s32 1, %s6
  %s9 = scalar_select 0, %s8, %s6
  $region1: #{_lambda_.1} parent=0
    #allocation2 [shape = 'u8[40960]{0}', space=vmem, size = 0xa000, scoped, tag = 'input window, operand 1, single buffered']
    #allocation3 [shape = 's32[1]{0}', space=sflag, size = 0x4, scoped, tag = 'scoped memory for _lambda_.1']
    #allocation4 [shape = 'u8[40960]{0}', space=vmem, size = 0xa000, scoped, tag = 'input window, operand 2, single buffered']
    #allocation5 [shape = 's32[1]{0}', space=sflag, size = 0x4, scoped, tag = 'scoped memory for _lambda_.1']
    %10 = vsyncpa [#allocation3], 0
    %11 = vsyncpa [#allocation5], 0
    // Predicated region
    $region2: #{_lambda_.1} parent=1 // pred_check
      _
    $region3: #{_lambda_.1} parent=1 // pred_check_branch
      %13 = sbr.rel (0) target = $region5
    $region4: #{_lambda_.1} parent=1 // pred_region
      _
    $region5: #{_lambda_.1} parent=1 // pred_fallthru
      _
    // Predicated region
    $region6: #{_lambda_.1} parent=1 // pred_check
      _
    $region7: #{_lambda_.1} parent=1 // pred_check_branch
      %15 = sbr.rel (0) target = $region9
    $region8: #{_lambda_.1} parent=1 // pred_region
      %s17 = ssub.s32 1280, 1280
      %18 = vsyncadd [#allocation3], %s17
      %s19 = sshll.u32 [#allocation2], 4
      %s20 = int_to_ptr.vmem [resolvable:$true] %s19
      %25 = dma.hbm_to_vmem [thread:$0]  %s1, 1280, %s20, [#allocation3], 128, 128, 8
    $region9: #{_lambda_.1} parent=1 // pred_fallthru
      _
    // Predicated region
    $region10: #{_lambda_.1} parent=1 // pred_check
      _
    $region11: #{_lambda_.1} parent=1 // pred_check_branch
      %27 = sbr.rel (0) target = $region13
    $region12: #{_lambda_.1} parent=1 // pred_region
      %s29 = ssub.s32 1280, 1280
      %30 = vsyncadd [#allocation5], %s29
      %s31 = sshll.u32 [#allocation4], 4
      %s32 = int_to_ptr.vmem [resolvable:$true] %s31
      %37 = dma.hbm_to_vmem [thread:$0]  %s2, 1280, %s32, [#allocation5], 128, 128, 8
    $region13: #{_lambda_.1} parent=1 // pred_fallthru
      _
    // Predicated region
    $region14: #{_lambda_.1} parent=1 // pred_check
      _
    $region15: #{_lambda_.1} parent=1 // pred_check_branch
      %39 = sbr.rel (0) target = $region17
    $region16: #{_lambda_.1} parent=1 // pred_region
      _
    $region17: #{_lambda_.1} parent=1 // pred_fallthru
      _
    // Predicated region
    $region18: #{_lambda_.1} parent=1 // pred_check
      _
    $region19: #{_lambda_.1} parent=1 // pred_check_branch
      %41 = sbr.rel (0) target = $region21
    $region20: #{_lambda_.1} parent=1 // pred_region
      _
    $region21: #{_lambda_.1} parent=1 // pred_fallthru
      _
    // Predicated region
    $region22: #{_lambda_.1} parent=1 // pred_check
      _
    $region23: #{_lambda_.1} parent=1 // pred_check_branch
      %43 = sbr.rel (0) target = $region25
    $region24: #{_lambda_.1} parent=1 // pred_region
      %44 = dma.done [#allocation3], 1280
    $region25: #{_lambda_.1} parent=1 // pred_fallthru
      _
    // Predicated region
    $region26: #{_lambda_.1} parent=1 // pred_check
      _
    $region27: #{_lambda_.1} parent=1 // pred_check_branch
      %46 = sbr.rel (0) target = $region29
    $region28: #{_lambda_.1} parent=1 // pred_region
      %47 = dma.done [#allocation5], 1280
    $region29: #{_lambda_.1} parent=1 // pred_fallthru
      _
    %v48 = vld [vmem:[#allocation2] sm:$0xff]
    %v49 = vld [vmem:[#allocation2 + $0x8] sm:$0xff]
    %v50 = vld [vmem:[#allocation2 + $0x10] sm:$0xff]
    %v51 = vld [vmem:[#allocation2 + $0x18] sm:$0xff]
    %v52 = vld [vmem:[#allocation2 + $0x20] sm:$0xff]
    %v53 = vld [vmem:[#allocation2 + $0x28] sm:$0xff]
    %v54 = vld [vmem:[#allocation2 + $0x30] sm:$0xff]
    %v55 = vld [vmem:[#allocation2 + $0x38] sm:$0xff]
    %v56 = vld [vmem:[#allocation2 + $0x40] sm:$0xff]
    %v57 = vld [vmem:[#allocation2 + $0x48] sm:$0xff]
    %v58 = vld [vmem:[%s0] sm:$0xff]
    %v59 = vld [vmem:[#allocation4] sm:$0xff]
    %v60 = vld [vmem:[#allocation4 + $0x8] sm:$0xff]
    %v61 = vld [vmem:[#allocation4 + $0x10] sm:$0xff]
    %v62 = vld [vmem:[#allocation4 + $0x18] sm:$0xff]
    %v63 = vld [vmem:[#allocation4 + $0x20] sm:$0xff]
    %v64 = vld [vmem:[#allocation4 + $0x28] sm:$0xff]
    %v65 = vld [vmem:[#allocation4 + $0x30] sm:$0xff]
    %v66 = vld [vmem:[#allocation4 + $0x38] sm:$0xff]
    %v67 = vld [vmem:[#allocation4 + $0x40] sm:$0xff]
    %v68 = vld [vmem:[#allocation4 + $0x48] sm:$0xff]
    %70 = vset.pattern.permute.xlu0 0
    %71 = vperm.xlu0 %70, %v59
    %v72 = vpop.permute.xlu0 %71
    %75 = vset.pattern.permute.xlu0 0
    %76 = vperm.xlu0 %75, %v60
    %v77 = vpop.permute.xlu0 %76
    %80 = vset.pattern.permute.xlu0 0
    %81 = vperm.xlu0 %80, %v61
    %v82 = vpop.permute.xlu0 %81
    %85 = vset.pattern.permute.xlu0 0
    %86 = vperm.xlu0 %85, %v62
    %v87 = vpop.permute.xlu0 %86
    %90 = vset.pattern.permute.xlu0 0
    %91 = vperm.xlu0 %90, %v63
    %v92 = vpop.permute.xlu0 %91
    %95 = vset.pattern.permute.xlu0 0
    %96 = vperm.xlu0 %95, %v64
    %v97 = vpop.permute.xlu0 %96
    %100 = vset.pattern.permute.xlu0 0
    %101 = vperm.xlu0 %100, %v65
    %v102 = vpop.permute.xlu0 %101
    %105 = vset.pattern.permute.xlu0 0
    %106 = vperm.xlu0 %105, %v66
    %v107 = vpop.permute.xlu0 %106
    %110 = vset.pattern.permute.xlu0 0
    %111 = vperm.xlu0 %110, %v67
    %v112 = vpop.permute.xlu0 %111
    %115 = vset.pattern.permute.xlu0 0
    %116 = vperm.xlu0 %115, %v68
    %v117 = vpop.permute.xlu0 %116
    %vm119 = vcmask 64512
    %v121 = vsel %vm119, %v48, 0
    %v124 = vsel %vm119, %v49, 0
    %v127 = vsel %vm119, %v50, 0
    %v130 = vsel %vm119, %v51, 0
    %v133 = vsel %vm119, %v52, 0
    %v136 = vsel %vm119, %v53, 0
    %v139 = vsel %vm119, %v54, 0
    %v142 = vsel %vm119, %v55, 0
    %v145 = vsel %vm119, %v56, 0
    %v148 = vsel %vm119, %v57, 0
    %150 = vmatprep.subr.mxu0 0.0
    %151 = vmatpush1.msra.mxu0 %v58
    %152 = vmatprep.subr.mxu0 0.0
    %153 = vmatpush1.msra.mxu0 0.0
    %154 = vmatprep.subr.mxu0 0.0
    %155 = vmatpush1.msra.mxu0 0.0
    %156 = vmatprep.subr.mxu0 0.0
    %157 = vmatpush1.msra.mxu0 0.0
    %158 = vmatprep.subr.mxu0 0.0
    %159 = vmatpush1.msra.mxu0 0.0
    %160 = vmatprep.subr.mxu0 0.0
    %161 = vmatpush1.msra.mxu0 0.0
    %162 = vmatprep.subr.mxu0 0.0
    %163 = vmatpush1.msra.mxu0 0.0
    %164 = vmatprep.subr.mxu0 0.0
    %165 = vmatpush1.msra.mxu0 0.0
    %166 = vmatprep.subr.mxu0 0.0
    %167 = vmatpush1.msra.mxu0 0.0
    %168 = vmatprep.subr.mxu0 0.0
    %169 = vmatpush1.msra.mxu0 0.0
    %170 = vmatprep.subr.mxu0 0.0
    %171 = vmatpush1.msra.mxu0 0.0
    %172 = vmatprep.subr.mxu0 0.0
    %173 = vmatpush1.msra.mxu0 0.0
    %174 = vmatprep.subr.mxu0 0.0
    %175 = vmatpush1.msra.mxu0 0.0
    %176 = vmatprep.subr.mxu0 0.0
    %177 = vmatpush1.msra.mxu0 0.0
    %178 = vmatprep.subr.mxu0 0.0
    %179 = vmatpush1.msra.mxu0 0.0
    %180 = vmatprep.subr.mxu0 0.0
    %181 = vmatpush1.msra.mxu0 0.0
    %182 = vmatprep.subr.mxu0 0.0
    %183 = vmatpush1.msra.mxu0 0.0
    %184 = vmatprep.subr.mxu0 0.0
    %185 = vmatpush1.msra.mxu0 0.0
    %186 = vmatprep.subr.mxu0 0.0
    %187 = vmatpush1.msra.mxu0 0.0
    %188 = vmatprep.subr.mxu0 0.0
    %189 = vmatpush1.msra.mxu0 0.0
    %190 = vmatprep.subr.mxu0 0.0
    %191 = vmatpush1.msra.mxu0 0.0
    %192 = vmatprep.subr.mxu0 0.0
    %193 = vmatpush1.msra.mxu0 0.0
    %194 = vmatprep.subr.mxu0 0.0
    %195 = vmatpush1.msra.mxu0 0.0
    %196 = vmatprep.subr.mxu0 0.0
    %197 = vmatpush1.msra.mxu0 0.0
    %198 = vmatprep.subr.mxu0 0.0
    %199 = vmatpush1.msra.mxu0 0.0
    %200 = vmatprep.subr.mxu0 0.0
    %201 = vmatpush1.msra.mxu0 0.0
    %202 = vmatprep.subr.mxu0 0.0
    %203 = vmatpush1.msra.mxu0 0.0
    %204 = vmatprep.subr.mxu0 0.0
    %205 = vmatpush1.msra.mxu0 0.0
    %206 = vmatprep.subr.mxu0 0.0
    %207 = vmatpush1.msra.mxu0 0.0
    %208 = vmatprep.subr.mxu0 0.0
    %209 = vmatpush1.msra.mxu0 0.0
    %210 = vmatprep.subr.mxu0 0.0
    %211 = vmatpush1.msra.mxu0 0.0
    %212 = vmatprep.subr.mxu0 0.0
    %213 = vmatpush1.msra.mxu0 0.0
    %214 = vmatprep.mubr.f32.mxu0 0.0
    %215 = vmatmul.mubr.f32.gmra.mrb[0].mxu0 %v121
    %v216 = vpop.f32.mrb[0].mxu0
    %v217 = vadd.f32 %v72, %v216
    %v218 = vpop.f32.mrb[0].mxu0
    %219 = vmatprep.mubr.f32.mxu0 0.0
    %220 = vmatmul.mubr.f32.gmra.mrb[0].mxu0 %v124
    %v221 = vpop.f32.mrb[0].mxu0
    %v222 = vadd.f32 %v77, %v221
    %v223 = vpop.f32.mrb[0].mxu0
    %224 = vmatprep.mubr.f32.mxu0 0.0
    %225 = vmatmul.mubr.f32.gmra.mrb[0].mxu0 %v127
    %v226 = vpop.f32.mrb[0].mxu0
    %v227 = vadd.f32 %v82, %v226
    %v228 = vpop.f32.mrb[0].mxu0
    %229 = vmatprep.mubr.f32.mxu0 0.0
    %230 = vmatmul.mubr.f32.gmra.mrb[0].mxu0 %v130
    %v231 = vpop.f32.mrb[0].mxu0
    %v232 = vadd.f32 %v87, %v231
    %v233 = vpop.f32.mrb[0].mxu0
    %234 = vmatprep.mubr.f32.mxu0 0.0
    %235 = vmatmul.mubr.f32.gmra.mrb[0].mxu0 %v133
    %v236 = vpop.f32.mrb[0].mxu0
    %v237 = vadd.f32 %v92, %v236
    %v238 = vpop.f32.mrb[0].mxu0
    %239 = vmatprep.mubr.f32.mxu0 0.0
    %240 = vmatmul.mubr.f32.gmra.mrb[0].mxu0 %v136
    %v241 = vpop.f32.mrb[0].mxu0
    %v242 = vadd.f32 %v97, %v241
    %v243 = vpop.f32.mrb[0].mxu0
    %244 = vmatprep.mubr.f32.mxu0 0.0
    %245 = vmatmul.mubr.f32.gmra.mrb[0].mxu0 %v139
    %v246 = vpop.f32.mrb[0].mxu0
    %v247 = vadd.f32 %v102, %v246
    %v248 = vpop.f32.mrb[0].mxu0
    %249 = vmatprep.mubr.f32.mxu0 0.0
    %250 = vmatmul.mubr.f32.gmra.mrb[0].mxu0 %v142
    %v251 = vpop.f32.mrb[0].mxu0
    %v252 = vadd.f32 %v107, %v251
    %v253 = vpop.f32.mrb[0].mxu0
    %254 = vmatprep.mubr.f32.mxu0 0.0
    %255 = vmatmul.mubr.f32.gmra.mrb[0].mxu0 %v145
    %v256 = vpop.f32.mrb[0].mxu0
    %v257 = vadd.f32 %v112, %v256
    %v258 = vpop.f32.mrb[0].mxu0
    %259 = vmatprep.mubr.f32.mxu0 0.0
    %260 = vmatmul.mubr.f32.gmra.mrb[0].mxu0 %v148
    %v261 = vpop.f32.mrb[0].mxu0
    %v262 = vadd.f32 %v117, %v261
    %v263 = vpop.f32.mrb[0].mxu0
    %264 = vdwg.mxu0
    %v265 = vmax.f32 %v217, 0.0
    %v266 = vmax.f32 %v222, 0.0
    %v267 = vmax.f32 %v227, 0.0
    %v268 = vmax.f32 %v232, 0.0
    %v269 = vmax.f32 %v237, 0.0
    %v270 = vmax.f32 %v242, 0.0
    %v271 = vmax.f32 %v247, 0.0
    %v272 = vmax.f32 %v252, 0.0
    %v273 = vmax.f32 %v257, 0.0
    %v274 = vmax.f32 %v262, 0.0
    %v275 = vld [vmem:[%s3] sm:$0xff]
    %v276 = vld [vmem:[%s4] sm:$0xff]
    %278 = vset.pattern.permute.xlu0 0
    %279 = vperm.xlu0 %278, %v276
    %v280 = vpop.permute.xlu0 %279
    %vm282 = vcmask 654336
    %v284 = vsel %vm282, %v275, 0
    %286 = vmatprep.subr.mxu0 0.0
    %287 = vmatpush1.msra.mxu0 %v265
    %288 = vmatprep.subr.mxu0 0.0
    %289 = vmatpush1.msra.mxu0 %v266
    %290 = vmatprep.subr.mxu0 0.0
    %291 = vmatpush1.msra.mxu0 %v267
    %292 = vmatprep.subr.mxu0 0.0
    %293 = vmatpush1.msra.mxu0 %v268
    %294 = vmatprep.subr.mxu0 0.0
    %295 = vmatpush1.msra.mxu0 %v269
    %296 = vmatprep.subr.mxu0 0.0
    %297 = vmatpush1.msra.mxu0 %v270
    %298 = vmatprep.subr.mxu0 0.0
    %299 = vmatpush1.msra.mxu0 %v271
    %300 = vmatprep.subr.mxu0 0.0
    %301 = vmatpush1.msra.mxu0 %v272
    %302 = vmatprep.subr.mxu0 0.0
    %303 = vmatpush1.msra.mxu0 %v273
    %304 = vmatprep.subr.mxu0 0.0
    %305 = vmatpush1.msra.mxu0 %v274
    %306 = vmatprep.subr.mxu0 0.0
    %307 = vmatpush1.msra.mxu0 0.0
    %308 = vmatprep.subr.mxu0 0.0
    %309 = vmatpush1.msra.mxu0 0.0
    %310 = vmatprep.subr.mxu0 0.0
    %311 = vmatpush1.msra.mxu0 0.0
    %312 = vmatprep.subr.mxu0 0.0
    %313 = vmatpush1.msra.mxu0 0.0
    %314 = vmatprep.subr.mxu0 0.0
    %315 = vmatpush1.msra.mxu0 0.0
    %316 = vmatprep.subr.mxu0 0.0
    %317 = vmatpush1.msra.mxu0 0.0
    %318 = vmatprep.subr.mxu0 0.0
    %319 = vmatpush1.msra.mxu0 0.0
    %320 = vmatprep.subr.mxu0 0.0
    %321 = vmatpush1.msra.mxu0 0.0
    %322 = vmatprep.subr.mxu0 0.0
    %323 = vmatpush1.msra.mxu0 0.0
    %324 = vmatprep.subr.mxu0 0.0
    %325 = vmatpush1.msra.mxu0 0.0
    %326 = vmatprep.subr.mxu0 0.0
    %327 = vmatpush1.msra.mxu0 0.0
    %328 = vmatprep.subr.mxu0 0.0
    %329 = vmatpush1.msra.mxu0 0.0
    %330 = vmatprep.subr.mxu0 0.0
    %331 = vmatpush1.msra.mxu0 0.0
    %332 = vmatprep.subr.mxu0 0.0
    %333 = vmatpush1.msra.mxu0 0.0
    %334 = vmatprep.subr.mxu0 0.0
    %335 = vmatpush1.msra.mxu0 0.0
    %336 = vmatprep.subr.mxu0 0.0
    %337 = vmatpush1.msra.mxu0 0.0
    %338 = vmatprep.subr.mxu0 0.0
    %339 = vmatpush1.msra.mxu0 0.0
    %340 = vmatprep.subr.mxu0 0.0
    %341 = vmatpush1.msra.mxu0 0.0
    %342 = vmatprep.subr.mxu0 0.0
    %343 = vmatpush1.msra.mxu0 0.0
    %344 = vmatprep.subr.mxu0 0.0
    %345 = vmatpush1.msra.mxu0 0.0
    %346 = vmatprep.subr.mxu0 0.0
    %347 = vmatpush1.msra.mxu0 0.0
    %348 = vmatprep.subr.mxu0 0.0
    %349 = vmatpush1.msra.mxu0 0.0
    %350 = vmatprep.mubr.f32.mxu0 0.0
    %351 = vmatmul.mubr.f32.gmra.mrb[0].mxu0 %v284
    %v352 = vpop.f32.mrb[0].mxu0
    %v353 = vadd.f32 %v280, %v352
    %v354 = vpop.f32.mrb[0].mxu0
    %355 = vdwg.mxu0
    %356 = vst [vmem:[%s5] sm:$0xff] %v353
    // Predicated region
    $region30: #{_lambda_.1} parent=1 // pred_check
      _
    $region31: #{_lambda_.1} parent=1 // pred_check_branch
      %358 = sbr.rel (0) target = $region33
    $region32: #{_lambda_.1} parent=1 // pred_region
      _
    $region33: #{_lambda_.1} parent=1 // pred_fallthru
      _
    // Predicated region
    $region34: #{_lambda_.1} parent=1 // pred_check
      _
    $region35: #{_lambda_.1} parent=1 // pred_check_branch
      %360 = sbr.rel (0) target = $region37
    $region36: #{_lambda_.1} parent=1 // pred_region
      _
    $region37: #{_lambda_.1} parent=1 // pred_fallthru
      _
    %361 = vsyncpa [#allocation3], 1
    %362 = vsyncpa [#allocation5], 1

</llo_original>
